<compile_context>
chip_gen: v7x
topology: tpu7x:2x2x1
jax: 0.10.0
libtpu: 0.0.40
codegen_flags: <defaults>
</compile_context>

<pallas_src>
import jax
import jax.numpy as jnp
from jax import lax
from jax.experimental import pallas as pl
from jax.experimental.pallas import tpu as pltpu


def _embedding_kernel(ids_ref, vocab_ref, out_ref):
    # ids_ref:   (tb, 1) int32  -- token ids for this tile
    # vocab_ref: (V, D)         -- full embedding table, resident in VMEM
    # out_ref:   (tb, D)
    tb = ids_ref.shape[0]
    v = vocab_ref.shape[0]
    col = lax.broadcasted_iota(jnp.int32, (tb, v), 1)          # (tb, V)
    onehot = (ids_ref[...] == col).astype(vocab_ref.dtype)     # (tb, V)
    out_ref[...] = jnp.dot(
        onehot, vocab_ref[...], preferred_element_type=jnp.float32
    ).astype(out_ref.dtype)


def _embedding_mask_kernel(ids_ref, mask_ref, vocab_ref, out_ref):
    # Mask folded into the one-hot BEFORE the matmul: (tb, V) select instead of
    # a (tb, D) post-matmul multiply (V < D in the common case, and it removes
    # a full read-modify pass over the output vregs).
    tb = ids_ref.shape[0]
    v = vocab_ref.shape[0]
    col = lax.broadcasted_iota(jnp.int32, (tb, v), 1)          # (tb, V)
    onehot = jnp.where(ids_ref[...] == col, mask_ref[...], 0.0)  # (tb, V) f32
    onehot = onehot.astype(vocab_ref.dtype)
    out_ref[...] = jnp.dot(
        onehot, vocab_ref[...], preferred_element_type=jnp.float32
    ).astype(out_ref.dtype)


def embedding_forward(tokens, vocab, mask=None, *, tb=512, batch_first=True):
    """Equivalent to EmbeddingLayer.forward(tokens, mask, training=False).

    tokens: (d0, d1) integer ids (batch_first only decides which axis is the
            batch; the math is identical, output is tokens.shape + (D,)).
    vocab:  (V, D) embedding table.
    mask:   optional (d0, d1) float mask.
    """
    del batch_first  # output shape is tokens.shape + (D,) in both layouts
    assert tokens.ndim == 2, "tokens must be 2-D (batch/steps)"
    V, D = vocab.shape
    d0, d1 = tokens.shape
    N = d0 * d1

    # --- choose the row tile / padded token count ---------------------------
    if N >= tb:
        n_pad = pl.cdiv(N, tb) * tb
    else:
        # tiny inputs: a single tile covering everything, 8-sublane aligned
        tb = max(8, pl.cdiv(N, 8) * 8)
        n_pad = tb
    pad = n_pad - N
    grid = n_pad // tb

    ids = tokens.reshape(-1).astype(jnp.int32)
    if pad:
        ids = jnp.pad(ids, (0, pad))          # pad with id 0 (always in range)
    ids = ids.reshape(n_pad, 1)

    # --- explicit VMEM budget (table may be double-buffered by the pipeline) --
    itemsize = jnp.dtype(vocab.dtype).itemsize
    table_bytes = V * D * itemsize
    tile_bytes = tb * D * itemsize + tb * 8 + tb * max(V, 128) * 4
    vmem_limit = int(max(32 * 1024 * 1024,
                         2 * table_bytes + 2 * tile_bytes + (2 << 20)))

    cparams = pltpu.CompilerParams(
        dimension_semantics=("parallel",),
        vmem_limit_bytes=vmem_limit,
    )

    ids_spec = pl.BlockSpec((tb, 1), lambda i: (i, 0))
    mask_spec = pl.BlockSpec((tb, 1), lambda i: (i, 0))
    vocab_spec = pl.BlockSpec((V, D), lambda i: (0, 0))   # constant block: fetched once
    out_spec = pl.BlockSpec((tb, D), lambda i: (i, 0))
    out_shape = jax.ShapeDtypeStruct((n_pad, D), vocab.dtype)

    if mask is None:
        out_flat = pl.pallas_call(
            _embedding_kernel,
            out_shape=out_shape,
            grid_spec=pltpu.PrefetchScalarGridSpec(
                num_scalar_prefetch=0,
                grid=(grid,),
                in_specs=[ids_spec, vocab_spec],
                out_specs=out_spec,
            ),
            compiler_params=cparams,
        )(ids, vocab)
    else:
        m = mask.reshape(-1).astype(jnp.float32)
        if pad:
            m = jnp.pad(m, (0, pad))          # padded rows are masked to zero
        m = m.reshape(n_pad, 1)
        out_flat = pl.pallas_call(
            _embedding_mask_kernel,
            out_shape=out_shape,
            grid_spec=pltpu.PrefetchScalarGridSpec(
                num_scalar_prefetch=0,
                grid=(grid,),
                in_specs=[ids_spec, mask_spec, vocab_spec],
                out_specs=out_spec,
            ),
            compiler_params=cparams,
        )(ids, m, vocab)

    return out_flat[:N].reshape(d0, d1, D)


if __name__ == "__main__":
    key = jax.random.PRNGKey(0)
    k_tok, k_vocab, k_mask, k_tok2 = jax.random.split(key, 4)

    # shapes implied by the module: n_samples=2, n_steps=8, opts['dim']=128
    B, T = 2, 8
    V, D = 16, 128

    tokens = jax.random.randint(k_tok, (B, T), 0, V, dtype=jnp.int32)
    vocab = jax.random.normal(k_vocab, (V, D), dtype=jnp.float32)
    mask = (jax.random.uniform(k_mask, (B, T)) > 0.3).astype(jnp.float32)

    # masked path
    out = jax.block_until_ready(embedding_forward(tokens, vocab, mask))
    ref = vocab[tokens.reshape(-1)].reshape(B, T, D) * mask[..., None]
    assert out.shape == (B, T, D)
    assert jnp.allclose(out, ref, atol=1e-5, rtol=1e-5)

    # mask-free path with a non-tile-aligned token count (exercises padding)
    B2, T2 = 3, 50
    tokens2 = jax.random.randint(k_tok2, (B2, T2), 0, V, dtype=jnp.int32)
    out2 = jax.block_until_ready(embedding_forward(tokens2, vocab))
    ref2 = vocab[tokens2.reshape(-1)].reshape(B2, T2, D)
    assert out2.shape == (B2, T2, D)
    assert jnp.allclose(out2, ref2, atol=1e-5, rtol=1e-5)

    print("KERNEL_OK")
</pallas_src>

<mosaic_0001>
module attributes {stable_mosaic.version = 11 : i64} {
  func.func @_embedding_mask_kernel(%arg0: i32, %arg1: memref<16x1xi32, #tpu.memory_space<vmem>>, %arg2: memref<16x1xf32, #tpu.memory_space<vmem>>, %arg3: memref<16x128xf32, #tpu.memory_space<vmem>>, %arg4: memref<16x128xf32, #tpu.memory_space<vmem>>) attributes {dimension_semantics = [#tpu.dimension_semantics<parallel>], iteration_bounds = array<i64: 1>, scalar_prefetch = 0 : i64, scratch_operands = 0 : i64, tpu.core_type = #tpu.core_type<tc>, window_params = [{transform_indices = @transform_0, window_bounds = array<i64: 16, 1>}, {transform_indices = @transform_1, window_bounds = array<i64: 16, 1>}, {pipeline_mode = #tpu.pipeline_mode<synchronous>, transform_indices = @transform_2, window_bounds = array<i64: 16, 128>}, {transform_indices = @transform_3, window_bounds = array<i64: 16, 128>}]} {
    %0 = tpu.iota {dimensions = array<i32: 1>} : vector<16x16xi32>
    %c0 = arith.constant 0 : index
    %c0_0 = arith.constant 0 : index
    %1 = vector.load %arg1[%c0, %c0_0] : memref<16x1xi32, #tpu.memory_space<vmem>>, vector<16x1xi32>
    %2 = vector.broadcast %1 : vector<16x1xi32> to vector<16x16xi32>
    %3 = arith.cmpi eq, %2, %0 : vector<16x16xi32>
    %c0_1 = arith.constant 0 : index
    %c0_2 = arith.constant 0 : index
    %4 = vector.load %arg2[%c0_1, %c0_2] : memref<16x1xf32, #tpu.memory_space<vmem>>, vector<16x1xf32>
    %cst = arith.constant 0.000000e+00 : f32
    %5 = vector.shape_cast %4 : vector<16x1xf32> to vector<16x1xf32>
    %6 = vector.broadcast %5 : vector<16x1xf32> to vector<16x16xf32>
    %7 = vector.broadcast %cst : f32 to vector<16x16xf32>
    %8 = arith.select %3, %6, %7 : vector<16x16xi1>, vector<16x16xf32>
    %c0_3 = arith.constant 0 : index
    %c0_4 = arith.constant 0 : index
    %9 = vector.load %arg3[%c0_3, %c0_4] : memref<16x128xf32, #tpu.memory_space<vmem>>, vector<16x128xf32>
    %cst_5 = arith.constant dense<0.000000e+00> : vector<16x128xf32>
    %10 = tpu.matmul %8, %9, %cst_5 {dimension_numbers = #tpu.dot_dimension_numbers<[1], [0], [0], [1], [0, 0, 1, 1], [], []>} : vector<16x16xf32>, vector<16x128xf32>, vector<16x128xf32> -> vector<16x128xf32>
    %c0_6 = arith.constant 0 : index
    %c0_7 = arith.constant 0 : index
    %11 = vector.load %arg4[%c0_6, %c0_7] : memref<16x128xf32, #tpu.memory_space<vmem>>, vector<16x128xf32>
    tpu.vector_store %arg4[%c0_6, %c0_7], %10 {strides = array<i32>} : memref<16x128xf32, #tpu.memory_space<vmem>>, vector<16x128xf32>,
    return
  }
  func.func @transform_0(%arg0: i32) -> (i32, i32) {
    %c0_i32 = arith.constant 0 : i32
    %c0_i32_0 = arith.constant 0 : i32
    return %arg0, %c0_i32 : i32, i32
  }
  func.func @transform_1(%arg0: i32) -> (i32, i32) {
    %c0_i32 = arith.constant 0 : i32
    %c0_i32_0 = arith.constant 0 : i32
    return %arg0, %c0_i32 : i32, i32
  }
  func.func @transform_2(%arg0: i32) -> (i32, i32) {
    %c0_i32 = arith.constant 0 : i32
    %c0_i32_0 = arith.constant 0 : i32
    %c0_i32_1 = arith.constant 0 : i32
    return %c0_i32, %c0_i32_0 : i32, i32
  }
  func.func @transform_3(%arg0: i32) -> (i32, i32) {
    %c0_i32 = arith.constant 0 : i32
    %c0_i32_0 = arith.constant 0 : i32
    return %arg0, %c0_i32 : i32, i32
  }
}

</mosaic_0001>

<llo_original>
// kernel: tpu_custom_call.1
$region0: #{tpu_custom_call.1}
  #allocation0 [shape = 'u32[]', space=smem, size = 0x4, offset = 0x4, fixed_abs, tag = 'smem constant byte address 0x4 - core index']
  #allocation1 [shape = 'u32[144,128]{1,0:T(1,128)}', space=vmem, size = 0x12000, scoped, tag = 'internal scratch']
  %s0 = inlined_call_operand.vmem [shape: s32[16,1], index: 0, kind: input, shape index: {}]
  %s1 = inlined_call_operand.vmem [shape: f32[16,1], index: 1, kind: input, shape index: {}]
  %s2 = inlined_call_operand.vmem [shape: f32[16,128], index: 2, kind: input, shape index: {}]
  %s3 = inlined_call_operand.hbm [shape: f32[16,128], index: 3, kind: output, shape index: {}]
  %s4 = sld [smem:[#allocation0]]
  $region22: #{tpu_custom_call.1} parent=0
    _
  %s6 = ssub.s32 1, %s4
  %s7 = scalar_select 0, %s6, %s4
  $region1: #{tpu_custom_call.1} parent=0
    #allocation2 [shape = 'u8[8192]{0}', space=vmem, size = 0x2000, scoped, tag = 'output window, operand 0, single buffered']
    #allocation3 [shape = 's32[1]{0}', space=sflag, size = 0x4, scoped, tag = 'scoped memory for tpu_custom_call.1']
    %8 = vsyncpa [#allocation3], 0
    // Predicated region
    $region2: #{tpu_custom_call.1} parent=1 // pred_check
      _
    $region3: #{tpu_custom_call.1} parent=1 // pred_check_branch
      %10 = sbr.rel (0) target = $region5
    $region4: #{tpu_custom_call.1} parent=1 // pred_region
      _
    $region5: #{tpu_custom_call.1} parent=1 // pred_fallthru
      _
    // Predicated region
    $region6: #{tpu_custom_call.1} parent=1 // pred_check
      _
    $region7: #{tpu_custom_call.1} parent=1 // pred_check_branch
      %12 = sbr.rel (0) target = $region9
    $region8: #{tpu_custom_call.1} parent=1 // pred_region
      _
    $region9: #{tpu_custom_call.1} parent=1 // pred_fallthru
      _
    // Predicated region
    $region10: #{tpu_custom_call.1} parent=1 // pred_check
      _
    $region11: #{tpu_custom_call.1} parent=1 // pred_check_branch
      %14 = sbr.rel (0) target = $region13
    $region12: #{tpu_custom_call.1} parent=1 // pred_region
      _
    $region13: #{tpu_custom_call.1} parent=1 // pred_fallthru
      _
    %v15 = vlaneseq
    %v16 = vand.u32 %v15, 127
    %v17 = vld [vmem:[%s0] sm:$0xff]
    %v18 = vld [vmem:[%s0 + $0x8] sm:$0xff]
    %19 = vset.pattern.permute.xlu0 0
    %20 = vperm.xlu0 %19, %v17
    %v21 = vpop.permute.xlu0 %20
    %22 = vset.pattern.permute.xlu0 0
    %23 = vperm.xlu0 %22, %v18
    %v24 = vpop.permute.xlu0 %23
    %vm25 = vcmp.eq.s32.totalorder %v21, %v16
    %vm26 = vcmp.eq.s32.totalorder %v24, %v16
    %v27 = vld [vmem:[%s1] sm:$0xff]
    %v28 = vld [vmem:[%s1 + $0x8] sm:$0xff]
    %30 = vset.pattern.permute.xlu0 0
    %31 = vperm.xlu0 %30, %v27
    %v32 = vpop.permute.xlu0 %31
    %35 = vset.pattern.permute.xlu0 0
    %36 = vperm.xlu0 %35, %v28
    %v37 = vpop.permute.xlu0 %36
    %v39 = vsel %vm25, %v32, 0.0
    %v40 = vsel %vm26, %v37, 0.0
    %v41 = vld [vmem:[%s2] sm:$0xff]
    %v42 = vld [vmem:[%s2 + $0x8] sm:$0xff]
    %vm43 = vcmask 130048
    %v45 = vsel %vm43, %v39, 0
    %v48 = vsel %vm43, %v40, 0
    %50 = vmatprep.subr.mxu0 0.0
    %51 = vmatpush1.msra.mxu0 %v41
    %52 = vmatprep.subr.mxu0 0.0
    %53 = vmatpush1.msra.mxu0 %v42
    %54 = vmatprep.subr.mxu0 0.0
    %55 = vmatpush1.msra.mxu0 0.0
    %56 = vmatprep.subr.mxu0 0.0
    %57 = vmatpush1.msra.mxu0 0.0
    %58 = vmatprep.subr.mxu0 0.0
    %59 = vmatpush1.msra.mxu0 0.0
    %60 = vmatprep.subr.mxu0 0.0
    %61 = vmatpush1.msra.mxu0 0.0
    %62 = vmatprep.subr.mxu0 0.0
    %63 = vmatpush1.msra.mxu0 0.0
    %64 = vmatprep.subr.mxu0 0.0
    %65 = vmatpush1.msra.mxu0 0.0
    %66 = vmatprep.subr.mxu0 0.0
    %67 = vmatpush1.msra.mxu0 0.0
    %68 = vmatprep.subr.mxu0 0.0
    %69 = vmatpush1.msra.mxu0 0.0
    %70 = vmatprep.subr.mxu0 0.0
    %71 = vmatpush1.msra.mxu0 0.0
    %72 = vmatprep.subr.mxu0 0.0
    %73 = vmatpush1.msra.mxu0 0.0
    %74 = vmatprep.subr.mxu0 0.0
    %75 = vmatpush1.msra.mxu0 0.0
    %76 = vmatprep.subr.mxu0 0.0
    %77 = vmatpush1.msra.mxu0 0.0
    %78 = vmatprep.subr.mxu0 0.0
    %79 = vmatpush1.msra.mxu0 0.0
    %80 = vmatprep.subr.mxu0 0.0
    %81 = vmatpush1.msra.mxu0 0.0
    %82 = vmatprep.subr.mxu0 0.0
    %83 = vmatpush1.msra.mxu0 0.0
    %84 = vmatprep.subr.mxu0 0.0
    %85 = vmatpush1.msra.mxu0 0.0
    %86 = vmatprep.subr.mxu0 0.0
    %87 = vmatpush1.msra.mxu0 0.0
    %88 = vmatprep.subr.mxu0 0.0
    %89 = vmatpush1.msra.mxu0 0.0
    %90 = vmatprep.subr.mxu0 0.0
    %91 = vmatpush1.msra.mxu0 0.0
    %92 = vmatprep.subr.mxu0 0.0
    %93 = vmatpush1.msra.mxu0 0.0
    %94 = vmatprep.subr.mxu0 0.0
    %95 = vmatpush1.msra.mxu0 0.0
    %96 = vmatprep.subr.mxu0 0.0
    %97 = vmatpush1.msra.mxu0 0.0
    %98 = vmatprep.subr.mxu0 0.0
    %99 = vmatpush1.msra.mxu0 0.0
    %100 = vmatprep.subr.mxu0 0.0
    %101 = vmatpush1.msra.mxu0 0.0
    %102 = vmatprep.subr.mxu0 0.0
    %103 = vmatpush1.msra.mxu0 0.0
    %104 = vmatprep.subr.mxu0 0.0
    %105 = vmatpush1.msra.mxu0 0.0
    %106 = vmatprep.subr.mxu0 0.0
    %107 = vmatpush1.msra.mxu0 0.0
    %108 = vmatprep.subr.mxu0 0.0
    %109 = vmatpush1.msra.mxu0 0.0
    %110 = vmatprep.subr.mxu0 0.0
    %111 = vmatpush1.msra.mxu0 0.0
    %112 = vmatprep.subr.mxu0 0.0
    %113 = vmatpush1.msra.mxu0 0.0
    %114 = vmatprep.mubr.f32.mxu0 0.0
    %115 = vmatmul.mubr.f32.gmra.mrb[0].mxu0 %v45
    %v116 = vpop.f32.mrb[0].mxu0
    %v117 = vadd.f32 0.0, %v116
    %v118 = vpop.f32.mrb[0].mxu0
    %119 = vmatprep.mubr.f32.mxu0 0.0
    %120 = vmatmul.mubr.f32.gmra.mrb[0].mxu0 %v48
    %v121 = vpop.f32.mrb[0].mxu0
    %v122 = vadd.f32 0.0, %v121
    %v123 = vpop.f32.mrb[0].mxu0
    %124 = vdwg.mxu0
    %125 = vst [vmem:[#allocation2] sm:$0xff] %v117
    %126 = vst [vmem:[#allocation2 + $0x8] sm:$0xff] %v122
    // Predicated region
    $region14: #{tpu_custom_call.1} parent=1 // pred_check
      _
    $region15: #{tpu_custom_call.1} parent=1 // pred_check_branch
      %128 = sbr.rel (0) target = $region17
    $region16: #{tpu_custom_call.1} parent=1 // pred_region
      %s130 = ssub.s32 256, 256
      %131 = vsyncadd [#allocation3], %s130
      %s132 = sshll.u32 [#allocation2], 4
      %s133 = int_to_ptr.vmem [resolvable:$true] %s132
      %138 = dma.vmem_to_hbm [thread:$0]  %s133, 256, %s3, [#allocation3], 128, 128, 8
    $region17: #{tpu_custom_call.1} parent=1 // pred_fallthru
      _
    // Predicated region
    $region18: #{tpu_custom_call.1} parent=1 // pred_check
      _
    $region19: #{tpu_custom_call.1} parent=1 // pred_check_branch
      %140 = sbr.rel (0) target = $region21
    $region20: #{tpu_custom_call.1} parent=1 // pred_region
      %141 = dma.done [#allocation3], 256
    $region21: #{tpu_custom_call.1} parent=1 // pred_fallthru
      _
    %142 = vsyncpa [#allocation3], 1

</llo_original>
